<compile_context>
chip_gen: v7x
topology: tpu7x:2x2x1
jax: 0.10.0
libtpu: 0.0.40
codegen_flags: <defaults>
</compile_context>

<pallas_src>
import functools
import math

import jax
import jax.numpy as jnp
from jax.experimental import pallas as pl
from jax.experimental.pallas import tpu as pltpu

_EPS = 1e-5                       # nn.LayerNorm default eps
_INV_SQRT2 = 0.7071067811865476   # 1/sqrt(2) for exact GELU
_SQRT_2_OVER_PI = 0.7978845608028654


def _round_up(x, m):
    return (x + m - 1) // m * m


def _cdiv(a, b):
    return (a + b - 1) // b


# --------------------------------------------------------------------------------------
# Fused (residual add + AddNorm) Pallas kernel
# --------------------------------------------------------------------------------------
def _layernorm(x, gamma, beta):
    mu = jnp.mean(x, axis=-1, keepdims=True)
    var = jnp.mean((x - mu) ** 2, axis=-1, keepdims=True)
    return (x - mu) * jax.lax.rsqrt(var + _EPS) * gamma + beta


def _addnorm_kernel(x_ref, r_ref, g1_ref, b1_ref, w1_ref, bw1_ref, w2_ref, bw2_ref,
                    g2_ref, b2_ref, o_ref, *, matmul_dtype, gelu_approximate):
    # fused outer residual: (irfft output) + (pre-FFT residual)
    x = x_ref[...].astype(jnp.float32) + r_ref[...].astype(jnp.float32)

    # --- norm1 ---
    y = _layernorm(x, g1_ref[...], b1_ref[...])

    # --- dropout(p=0) is identity; feed_forward + inner residual ---
    # Weights arrive already cast (wrapper-side) -> no per-step weight casts here.
    ya = y.astype(matmul_dtype) if matmul_dtype is not None else y
    h = jnp.dot(ya, w1_ref[...], preferred_element_type=jnp.float32) + bw1_ref[...]
    if gelu_approximate:
        # tanh-approx GELU: tanh runs on the EUP (otherwise-idle VLIW slot).
        h = 0.5 * h * (1.0 + jnp.tanh(_SQRT_2_OVER_PI * (h + 0.044715 * h * h * h)))
    else:
        # exact GELU (PyTorch nn.GELU default): 0.5*h*(1+erf(h/sqrt(2)))
        h = 0.5 * h * (1.0 + jax.lax.erf(h * jnp.float32(_INV_SQRT2)))
    ha = h.astype(matmul_dtype) if matmul_dtype is not None else h
    z = jnp.dot(ha, w2_ref[...], preferred_element_type=jnp.float32) + bw2_ref[...] + y

    # --- norm2 ---
    o_ref[...] = _layernorm(z, g2_ref[...], b2_ref[...]).astype(o_ref.dtype)


def _vmem_capacity_bytes():
    try:
        info = pltpu.get_tpu_info()
        cap = getattr(info, "vmem_capacity_bytes", None)
        if cap:
            return int(cap)
    except Exception:
        pass
    return 64 * 1024 * 1024  # conservative fallback (v7x per-TC VMEM)


@functools.partial(jax.jit,
                   static_argnames=("block_rows", "matmul_dtype", "gelu_approximate"))
def addnorm_pallas(x, residual, params, *, block_rows=512,
                   matmul_dtype=jnp.bfloat16, gelu_approximate=True):
    """Fused AddNorm(x + residual) forward.  x, residual: [..., D] float32."""
    orig_shape = x.shape
    D = orig_shape[-1]
    rows = math.prod(orig_shape[:-1])
    x2 = x.reshape(rows, D)
    r2 = residual.reshape(rows, D)

    d_ff = params["w1"].shape[1]

    # Row tile: multiple of 8; no wrapper-side padding (trailing partial block is
    # masked on write and row-wise ops never mix rows, so pad rows are harmless).
    tm = min(block_rows, _round_up(rows, 8))
    tm = max(8, _round_up(tm, 8))
    num_blocks = _cdiv(rows, tm)
    if num_blocks < 2 and rows > 8:
        # give the "parallel" axis >=2 steps so v7x can shard across both TensorCores
        tm = max(8, _round_up(_cdiv(rows, 2), 8))
        num_blocks = _cdiv(rows, tm)
    grid = (num_blocks,)

    # Cast weights ONCE in the wrapper (bf16 on the MXU, f32 accumulation inside the
    # kernel via preferred_element_type).  Biases / LN params stay f32.
    w1 = params["w1"]                    # (D, d_ff), already transposed
    w2 = params["w2"]                    # (d_ff, D)
    if matmul_dtype is not None:
        w1 = w1.astype(matmul_dtype)
        w2 = w2.astype(matmul_dtype)

    g1 = params["g1"].reshape(1, D)
    b1 = params["b1"].reshape(1, D)
    bw1 = params["bw1"].reshape(1, d_ff)
    bw2 = params["bw2"].reshape(1, D)
    g2 = params["g2"].reshape(1, D)
    b2 = params["b2"].reshape(1, D)

    # Constant index_map => weights/biases are DMA'd once and stay VMEM-resident.
    # TODO(synk): for very large D/d_ff on v7x, K-tile d_ff (extra "arbitrary" grid
    # axis + f32 VMEM accumulator) instead of holding both full weights resident.
    full = lambda shape: pl.BlockSpec(shape, lambda i: (0, 0))

    # Generation-aware VMEM budget: request what the tiles need, capped at ~75% of
    # the physical per-core VMEM (~96 MiB on v5e/v6e, ~48 MiB on v7x).
    f32 = 4
    wbytes = 2 if matmul_dtype is not None else 4
    est = (3 * 2 * tm * D * f32             # x + residual + out tiles, double-buffered
           + 2 * 2 * D * d_ff * wbytes      # w1 + w2
           + 8 * tm * max(D, d_ff) * f32    # in-kernel temporaries (y, h, z, ...)
           + 16 * max(D, d_ff) * f32)       # biases / LN params
    cap = _vmem_capacity_bytes()
    vmem_limit = int(min(max(2 * est, 32 * 1024 * 1024), (3 * cap) // 4))

    cost = pl.CostEstimate(
        flops=2 * 2 * rows * D * d_ff + 12 * rows * D,
        transcendentals=rows * d_ff,
        bytes_accessed=(3 * rows * D + 2 * d_ff + 6 * D) * f32 + 2 * D * d_ff * wbytes,
    )

    kernel = functools.partial(_addnorm_kernel, matmul_dtype=matmul_dtype,
                               gelu_approximate=gelu_approximate)

    out = pl.pallas_call(
        kernel,
        out_shape=jax.ShapeDtypeStruct((rows, D), x.dtype),
        grid_spec=pltpu.PrefetchScalarGridSpec(
            num_scalar_prefetch=0,
            grid=grid,
            in_specs=[
                pl.BlockSpec((tm, D), lambda i: (i, 0)),  # x tile
                pl.BlockSpec((tm, D), lambda i: (i, 0)),  # residual tile (fused add)
                full((1, D)), full((1, D)),               # norm1 gamma/beta
                full((D, d_ff)), full((1, d_ff)),         # linear1 W, b
                full((d_ff, D)), full((1, D)),            # linear2 W, b
                full((1, D)), full((1, D)),               # norm2 gamma/beta
            ],
            out_specs=pl.BlockSpec((tm, D), lambda i: (i, 0)),
        ),
        compiler_params=pltpu.CompilerParams(
            dimension_semantics=("parallel",),
            vmem_limit_bytes=vmem_limit,
        ),
        cost_estimate=cost,
    )(x2, r2, g1, b1, w1, bw1, w2, bw2, g2, b2)

    return out.reshape(orig_shape)


def addnorm_reference(x, residual, p):
    """Pure-JAX reference of (x+residual) -> AddNorm.forward (dropout p=0 => identity)."""
    x = (x + residual).astype(jnp.float32)
    y = _layernorm(x, p["g1"], p["b1"])
    h = jnp.dot(y, p["w1"], precision=jax.lax.Precision.HIGHEST) + p["bw1"]
    h = 0.5 * h * (1.0 + jax.lax.erf(h * _INV_SQRT2))
    z = jnp.dot(h, p["w2"], precision=jax.lax.Precision.HIGHEST) + p["bw2"] + y
    return _layernorm(z, p["g2"], p["b2"])


# --------------------------------------------------------------------------------------
# FtLayer / FtBlock forward (frequency-domain part in plain JAX)
# --------------------------------------------------------------------------------------
def _filter(x, length, bank_c, num_filter):
    # use_bank=True path of FtLayer.filter (mirrors the PyTorch expression exactly,
    # including its `pi/2*num_filter` operator precedence).
    power = x * x / length
    out = jnp.zeros_like(x)
    for k in range(num_filter):
        cos_k = math.cos((2 * (k + 1) - 1) * math.pi / 2 * num_filter)
        out = out + power * bank_c[k] * cos_k
    return out


def _gate(freq, select_c, conv_w, conv_b):
    # (complex mult) -> AvgPool1d over the full length -> Conv1d(D, D, kernel_size=1)
    g = jnp.mean((freq * select_c).real, axis=1)   # (B, D)
    g = g @ conv_w.T + conv_b                      # (B, D)
    return g[:, None, :]                           # (B, 1, D)


def ft_layer_forward(text, image, p, addnorm_fn):
    x_text, x_image = text, image
    B, S, D = text.shape
    _, N, _ = image.shape
    s = S // 2 + 1
    n = N // 2 + 1

    # TODO(synk): rfft/irfft and the complex-valued filter-bank / gating arithmetic
    # have no Pallas TPU equivalent (no FFT primitive, no complex dtype); they run
    # as plain XLA ops here.
    _text = jnp.fft.rfft(text, axis=1, norm="ortho")     # (B, s, D) complex64
    _image = jnp.fft.rfft(image, axis=1, norm="ortho")   # (B, n, D) complex64

    _text = _filter(_text, s, p["text_filter_bank"], p["num_filter"])
    _image = _filter(_image, n, p["image_filter_bank"], p["num_filter"])

    # TextFrequencySelection: gate text by the (filtered) image spectrum.
    img_gate = _gate(_image, p["i2t_select"], p["i2t_conv_w"], p["i2t_conv_b"])
    _text = _text * img_gate
    # ImageFrequencySelection: gate image by the (already gated) text spectrum.
    txt_gate = _gate(_text, p["t2i_select"], p["t2i_conv_w"], p["t2i_conv_b"])
    _image = _image * txt_gate

    text = jnp.fft.irfft(_text, n=S, axis=1, norm="ortho")
    image = jnp.fft.irfft(_image, n=N, axis=1, norm="ortho")

    # Outer residual is fused into the kernel (extra tiled input).
    # TODO(synk): the two per-modality AddNorm calls could be merged into a single
    # pallas_call (stacked params + scalar-prefetch modality index) to halve fixed
    # launch overhead at tiny shapes.
    text = addnorm_fn(text, x_text, p["text_add_norm"])
    image = addnorm_fn(image, x_image, p["image_add_norm"])
    return text, image


def ft_block_forward(text, image, layers, addnorm_fn):
    for p in layers:
        text, image = ft_layer_forward(text, image, p, addnorm_fn)
    return text, image


# --------------------------------------------------------------------------------------
# Parameter init (deterministic, matching the PyTorch module's parameter shapes)
# --------------------------------------------------------------------------------------
def _complex(a):
    return jax.lax.complex(a[..., 0], a[..., 1])


def init_addnorm_params(key, d_model):
    d_ff = d_model  # FeedForward(d_model, d_model) inside AddNorm
    k1, k2, k3, k4 = jax.random.split(key, 4)
    bound1 = 1.0 / math.sqrt(d_model)
    bound2 = 1.0 / math.sqrt(d_ff)
    return {
        "g1": jnp.ones((d_model,), jnp.float32),
        "b1": jnp.zeros((d_model,), jnp.float32),
        # Linear1: PyTorch weight is (d_ff, d_model); stored transposed (d_model, d_ff)
        "w1": jax.random.uniform(k1, (d_model, d_ff), jnp.float32, -bound1, bound1),
        "bw1": jax.random.uniform(k2, (d_ff,), jnp.float32, -bound1, bound1),
        # Linear2: PyTorch weight is (d_model, d_ff); stored transposed (d_ff, d_model)
        "w2": jax.random.uniform(k3, (d_ff, d_model), jnp.float32, -bound2, bound2),
        "bw2": jax.random.uniform(k4, (d_model,), jnp.float32, -bound2, bound2),
        "g2": jnp.ones((d_model,), jnp.float32),
        "b2": jnp.zeros((d_model,), jnp.float32),
    }


def init_ft_layer_params(key, d_model, s, n, num_filter=2):
    ks = jax.random.split(key, 10)
    bound = 1.0 / math.sqrt(d_model)
    return {
        "num_filter": num_filter,
        "text_filter_bank": _complex(
            jax.random.normal(ks[0], (num_filter, s, d_model, 2), jnp.float32)),
        "image_filter_bank": _complex(
            jax.random.normal(ks[1], (num_filter, n, d_model, 2), jnp.float32)),
        # text_weight / image_weight are unused when use_bank=True (module default);
        # kept only for shape parity with the PyTorch module.
        "text_weight": _complex(jax.random.normal(ks[2], (s, d_model, 2), jnp.float32)),
        "image_weight": _complex(jax.random.normal(ks[3], (n, d_model, 2), jnp.float32)),
        # Image2TextGate(n, d_model)
        "i2t_select": _complex(jax.random.normal(ks[4], (n, d_model, 2), jnp.float32)),
        "i2t_conv_w": jax.random.uniform(ks[5], (d_model, d_model), jnp.float32, -bound, bound),
        "i2t_conv_b": jax.random.uniform(ks[6], (d_model,), jnp.float32, -bound, bound),
        # Text2ImageGate(s, d_model)
        "t2i_select": _complex(jax.random.normal(ks[7], (s, d_model, 2), jnp.float32)),
        "t2i_conv_w": jax.random.uniform(ks[8], (d_model, d_model), jnp.float32, -bound, bound),
        "t2i_conv_b": jax.random.uniform(ks[9], (d_model,), jnp.float32, -bound, bound),
        "text_add_norm": init_addnorm_params(jax.random.fold_in(key, 101), d_model),
        "image_add_norm": init_addnorm_params(jax.random.fold_in(key, 202), d_model),
    }


# --------------------------------------------------------------------------------------
if __name__ == "__main__":
    B = 2
    S = 8      # text sequence length  -> s = S//2 + 1 = 5
    N = 16     # image tokens (4x4)    -> n = N//2 + 1 = 9
    D = 128    # d_model (multiple of 128 -> lane-dense kernel output)

    key = jax.random.PRNGKey(0)
    k_text, k_image, k_params = jax.random.split(key, 3)
    text = jax.random.normal(k_text, (B, S, D), jnp.float32)
    image = jax.random.normal(k_image, (B, N, D), jnp.float32)

    num_layer = 1
    layers = [
        init_ft_layer_params(jax.random.fold_in(k_params, i), D, S // 2 + 1, N // 2 + 1)
        for i in range(num_layer)
    ]

    # Fast Pallas path (default: bf16 MXU operands, f32 accumulation, tanh-approx GELU)
    out_text, out_image = ft_block_forward(text, image, layers, addnorm_pallas)
    out_text, out_image = jax.block_until_ready((out_text, out_image))

    # Exact-parity Pallas path (f32 matmuls, erf GELU) for a tight correctness check
    exact_fn = functools.partial(addnorm_pallas, matmul_dtype=None, gelu_approximate=False)
    ex_text, ex_image = ft_block_forward(text, image, layers, exact_fn)
    ex_text, ex_image = jax.block_until_ready((ex_text, ex_image))

    # Pure-JAX reference (identical FFT/gating code; only the AddNorm differs)
    ref_text, ref_image = ft_block_forward(text, image, layers, addnorm_reference)

    assert out_text.shape == (B, S, D) and out_image.shape == (B, N, D)
    assert jnp.allclose(ex_text, ref_text, atol=1e-3, rtol=1e-3), "exact text mismatch"
    assert jnp.allclose(ex_image, ref_image, atol=1e-3, rtol=1e-3), "exact image mismatch"
    # bf16 MXU operands + tanh GELU deviate slightly from the f32/erf reference
    assert jnp.allclose(out_text, ref_text, atol=2e-2, rtol=2e-2), "fast text mismatch"
    assert jnp.allclose(out_image, ref_image, atol=2e-2, rtol=2e-2), "fast image mismatch"
    print("KERNEL_OK")
</pallas_src>

<mosaic_0001>
module attributes {stable_mosaic.version = 11 : i64} {
  func.func @_addnorm_kernel(%arg0: i32, %arg1: memref<8x128xf32, #tpu.memory_space<vmem>>, %arg2: memref<8x128xf32, #tpu.memory_space<vmem>>, %arg3: memref<1x128xf32, #tpu.memory_space<vmem>>, %arg4: memref<1x128xf32, #tpu.memory_space<vmem>>, %arg5: memref<128x128xbf16, #tpu.memory_space<vmem>>, %arg6: memref<1x128xf32, #tpu.memory_space<vmem>>, %arg7: memref<128x128xbf16, #tpu.memory_space<vmem>>, %arg8: memref<1x128xf32, #tpu.memory_space<vmem>>, %arg9: memref<1x128xf32, #tpu.memory_space<vmem>>, %arg10: memref<1x128xf32, #tpu.memory_space<vmem>>, %arg11: memref<8x128xf32, #tpu.memory_space<vmem>>) attributes {dimension_semantics = [#tpu.dimension_semantics<parallel>], iteration_bounds = array<i64: 2>, scalar_prefetch = 0 : i64, scratch_operands = 0 : i64, tpu.core_type = #tpu.core_type<tc>, window_params = [{transform_indices = @transform_0, window_bounds = array<i64: 8, 128>}, {transform_indices = @transform_1, window_bounds = array<i64: 8, 128>}, {pipeline_mode = #tpu.pipeline_mode<synchronous>, transform_indices = @transform_2, window_bounds = array<i64: 1, 128>}, {pipeline_mode = #tpu.pipeline_mode<synchronous>, transform_indices = @transform_3, window_bounds = array<i64: 1, 128>}, {pipeline_mode = #tpu.pipeline_mode<synchronous>, transform_indices = @transform_4, window_bounds = array<i64: 128, 128>}, {pipeline_mode = #tpu.pipeline_mode<synchronous>, transform_indices = @transform_5, window_bounds = array<i64: 1, 128>}, {pipeline_mode = #tpu.pipeline_mode<synchronous>, transform_indices = @transform_6, window_bounds = array<i64: 128, 128>}, {pipeline_mode = #tpu.pipeline_mode<synchronous>, transform_indices = @transform_7, window_bounds = array<i64: 1, 128>}, {pipeline_mode = #tpu.pipeline_mode<synchronous>, transform_indices = @transform_8, window_bounds = array<i64: 1, 128>}, {pipeline_mode = #tpu.pipeline_mode<synchronous>, transform_indices = @transform_9, window_bounds = array<i64: 1, 128>}, {transform_indices = @transform_10, window_bounds = array<i64: 8, 128>}]} {
    %c0 = arith.constant 0 : index
    %c0_0 = arith.constant 0 : index
    %0 = vector.load %arg1[%c0, %c0_0] : memref<8x128xf32, #tpu.memory_space<vmem>>, vector<8x128xf32>
    %c0_1 = arith.constant 0 : index
    %c0_2 = arith.constant 0 : index
    %1 = vector.load %arg2[%c0_1, %c0_2] : memref<8x128xf32, #tpu.memory_space<vmem>>, vector<8x128xf32>
    %2 = arith.addf %0, %1 : vector<8x128xf32>
    %c0_3 = arith.constant 0 : index
    %c0_4 = arith.constant 0 : index
    %3 = vector.load %arg3[%c0_3, %c0_4] : memref<1x128xf32, #tpu.memory_space<vmem>>, vector<1x128xf32>
    %c0_5 = arith.constant 0 : index
    %c0_6 = arith.constant 0 : index
    %4 = vector.load %arg4[%c0_5, %c0_6] : memref<1x128xf32, #tpu.memory_space<vmem>>, vector<1x128xf32>
    %cst = arith.constant dense<0.000000e+00> : vector<8xf32>
    %5 = vector.multi_reduction <add>, %2, %cst [1] : vector<8x128xf32> to vector<8xf32>
    %6 = vector.shape_cast %5 : vector<8xf32> to vector<8x1xf32>
    %cst_7 = arith.constant 1.280000e+02 : f32
    %7 = vector.broadcast %cst_7 : f32 to vector<8x1xf32>
    %8 = arith.divf %6, %7 : vector<8x1xf32>
    %9 = vector.broadcast %8 : vector<8x1xf32> to vector<8x128xf32>
    %10 = arith.subf %2, %9 : vector<8x128xf32>
    %11 = arith.mulf %10, %10 : vector<8x128xf32>
    %cst_8 = arith.constant dense<0.000000e+00> : vector<8xf32>
    %12 = vector.multi_reduction <add>, %11, %cst_8 [1] : vector<8x128xf32> to vector<8xf32>
    %13 = vector.shape_cast %12 : vector<8xf32> to vector<8x1xf32>
    %cst_9 = arith.constant 1.280000e+02 : f32
    %14 = vector.broadcast %cst_9 : f32 to vector<8x1xf32>
    %15 = arith.divf %13, %14 : vector<8x1xf32>
    %16 = vector.broadcast %8 : vector<8x1xf32> to vector<8x128xf32>
    %17 = arith.subf %2, %16 : vector<8x128xf32>
    %cst_10 = arith.constant 9.99999974E-6 : f32
    %18 = vector.broadcast %cst_10 : f32 to vector<8x1xf32>
    %19 = arith.addf %15, %18 : vector<8x1xf32>
    %20 = math.rsqrt %19 : vector<8x1xf32>
    %21 = vector.broadcast %20 : vector<8x1xf32> to vector<8x128xf32>
    %22 = arith.mulf %17, %21 : vector<8x128xf32>
    %23 = vector.broadcast %3 : vector<1x128xf32> to vector<8x128xf32>
    %24 = arith.mulf %22, %23 : vector<8x128xf32>
    %25 = vector.broadcast %4 : vector<1x128xf32> to vector<8x128xf32>
    %26 = arith.addf %24, %25 : vector<8x128xf32>
    %27 = arith.truncf %26 : vector<8x128xf32> to vector<8x128xbf16>
    %c0_11 = arith.constant 0 : index
    %c0_12 = arith.constant 0 : index
    %28 = vector.load %arg5[%c0_11, %c0_12] : memref<128x128xbf16, #tpu.memory_space<vmem>>, vector<128x128xbf16>
    %cst_13 = arith.constant dense<0.000000e+00> : vector<8x128xf32>
    %29 = tpu.matmul %27, %28, %cst_13 {dimension_numbers = #tpu.dot_dimension_numbers<[1], [0], [0], [1], [0, 0, 1, 1], [], []>} : vector<8x128xbf16>, vector<128x128xbf16>, vector<8x128xf32> -> vector<8x128xf32>
    %c0_14 = arith.constant 0 : index
    %c0_15 = arith.constant 0 : index
    %30 = vector.load %arg6[%c0_14, %c0_15] : memref<1x128xf32, #tpu.memory_space<vmem>>, vector<1x128xf32>
    %31 = vector.broadcast %30 : vector<1x128xf32> to vector<8x128xf32>
    %32 = arith.addf %29, %31 : vector<8x128xf32>
    %cst_16 = arith.constant 5.000000e-01 : f32
    %33 = vector.broadcast %cst_16 : f32 to vector<8x128xf32>
    %34 = arith.mulf %33, %32 : vector<8x128xf32>
    %cst_17 = arith.constant 4.471500e-02 : f32
    %35 = vector.broadcast %cst_17 : f32 to vector<8x128xf32>
    %36 = arith.mulf %35, %32 : vector<8x128xf32>
    %37 = arith.mulf %36, %32 : vector<8x128xf32>
    %38 = arith.mulf %37, %32 : vector<8x128xf32>
    %39 = arith.addf %32, %38 : vector<8x128xf32>
    %cst_18 = arith.constant 0.797884583 : f32
    %40 = vector.broadcast %cst_18 : f32 to vector<8x128xf32>
    %41 = arith.mulf %40, %39 : vector<8x128xf32>
    %42 = math.tanh %41 : vector<8x128xf32>
    %cst_19 = arith.constant 1.000000e+00 : f32
    %43 = vector.broadcast %cst_19 : f32 to vector<8x128xf32>
    %44 = arith.addf %43, %42 : vector<8x128xf32>
    %45 = arith.mulf %34, %44 : vector<8x128xf32>
    %46 = arith.truncf %45 : vector<8x128xf32> to vector<8x128xbf16>
    %c0_20 = arith.constant 0 : index
    %c0_21 = arith.constant 0 : index
    %47 = vector.load %arg7[%c0_20, %c0_21] : memref<128x128xbf16, #tpu.memory_space<vmem>>, vector<128x128xbf16>
    %cst_22 = arith.constant dense<0.000000e+00> : vector<8x128xf32>
    %48 = tpu.matmul %46, %47, %cst_22 {dimension_numbers = #tpu.dot_dimension_numbers<[1], [0], [0], [1], [0, 0, 1, 1], [], []>} : vector<8x128xbf16>, vector<128x128xbf16>, vector<8x128xf32> -> vector<8x128xf32>
    %c0_23 = arith.constant 0 : index
    %c0_24 = arith.constant 0 : index
    %49 = vector.load %arg8[%c0_23, %c0_24] : memref<1x128xf32, #tpu.memory_space<vmem>>, vector<1x128xf32>
    %50 = vector.broadcast %49 : vector<1x128xf32> to vector<8x128xf32>
    %51 = arith.addf %48, %50 : vector<8x128xf32>
    %52 = arith.addf %51, %26 : vector<8x128xf32>
    %c0_25 = arith.constant 0 : index
    %c0_26 = arith.constant 0 : index
    %53 = vector.load %arg9[%c0_25, %c0_26] : memref<1x128xf32, #tpu.memory_space<vmem>>, vector<1x128xf32>
    %c0_27 = arith.constant 0 : index
    %c0_28 = arith.constant 0 : index
    %54 = vector.load %arg10[%c0_27, %c0_28] : memref<1x128xf32, #tpu.memory_space<vmem>>, vector<1x128xf32>
    %cst_29 = arith.constant dense<0.000000e+00> : vector<8xf32>
    %55 = vector.multi_reduction <add>, %52, %cst_29 [1] : vector<8x128xf32> to vector<8xf32>
    %56 = vector.shape_cast %55 : vector<8xf32> to vector<8x1xf32>
    %cst_30 = arith.constant 1.280000e+02 : f32
    %57 = vector.broadcast %cst_30 : f32 to vector<8x1xf32>
    %58 = arith.divf %56, %57 : vector<8x1xf32>
    %59 = vector.broadcast %58 : vector<8x1xf32> to vector<8x128xf32>
    %60 = arith.subf %52, %59 : vector<8x128xf32>
    %61 = arith.mulf %60, %60 : vector<8x128xf32>
    %cst_31 = arith.constant dense<0.000000e+00> : vector<8xf32>
    %62 = vector.multi_reduction <add>, %61, %cst_31 [1] : vector<8x128xf32> to vector<8xf32>
    %63 = vector.shape_cast %62 : vector<8xf32> to vector<8x1xf32>
    %cst_32 = arith.constant 1.280000e+02 : f32
    %64 = vector.broadcast %cst_32 : f32 to vector<8x1xf32>
    %65 = arith.divf %63, %64 : vector<8x1xf32>
    %66 = vector.broadcast %58 : vector<8x1xf32> to vector<8x128xf32>
    %67 = arith.subf %52, %66 : vector<8x128xf32>
    %cst_33 = arith.constant 9.99999974E-6 : f32
    %68 = vector.broadcast %cst_33 : f32 to vector<8x1xf32>
    %69 = arith.addf %65, %68 : vector<8x1xf32>
    %70 = math.rsqrt %69 : vector<8x1xf32>
    %71 = vector.broadcast %70 : vector<8x1xf32> to vector<8x128xf32>
    %72 = arith.mulf %67, %71 : vector<8x128xf32>
    %73 = vector.broadcast %53 : vector<1x128xf32> to vector<8x128xf32>
    %74 = arith.mulf %72, %73 : vector<8x128xf32>
    %75 = vector.broadcast %54 : vector<1x128xf32> to vector<8x128xf32>
    %76 = arith.addf %74, %75 : vector<8x128xf32>
    %c0_34 = arith.constant 0 : index
    %c0_35 = arith.constant 0 : index
    %77 = vector.load %arg11[%c0_34, %c0_35] : memref<8x128xf32, #tpu.memory_space<vmem>>, vector<8x128xf32>
    tpu.vector_store %arg11[%c0_34, %c0_35], %76 {strides = array<i32>} : memref<8x128xf32, #tpu.memory_space<vmem>>, vector<8x128xf32>,
    return
  }
  func.func @transform_0(%arg0: i32) -> (i32, i32) {
    %c0_i32 = arith.constant 0 : i32
    %c0_i32_0 = arith.constant 0 : i32
    return %arg0, %c0_i32 : i32, i32
  }
  func.func @transform_1(%arg0: i32) -> (i32, i32) {
    %c0_i32 = arith.constant 0 : i32
    %c0_i32_0 = arith.constant 0 : i32
    return %arg0, %c0_i32 : i32, i32
  }
  func.func @transform_2(%arg0: i32) -> (i32, i32) {
    %c0_i32 = arith.constant 0 : i32
    %c0_i32_0 = arith.constant 0 : i32
    %c0_i32_1 = arith.constant 0 : i32
    return %c0_i32, %c0_i32_0 : i32, i32
  }
  func.func @transform_3(%arg0: i32) -> (i32, i32) {
    %c0_i32 = arith.constant 0 : i32
    %c0_i32_0 = arith.constant 0 : i32
    %c0_i32_1 = arith.constant 0 : i32
    return %c0_i32, %c0_i32_0 : i32, i32
  }
  func.func @transform_4(%arg0: i32) -> (i32, i32) {
    %c0_i32 = arith.constant 0 : i32
    %c0_i32_0 = arith.constant 0 : i32
    %c0_i32_1 = arith.constant 0 : i32
    return %c0_i32, %c0_i32_0 : i32, i32
  }
  func.func @transform_5(%arg0: i32) -> (i32, i32) {
    %c0_i32 = arith.constant 0 : i32
    %c0_i32_0 = arith.constant 0 : i32
    %c0_i32_1 = arith.constant 0 : i32
    return %c0_i32, %c0_i32_0 : i32, i32
  }
  func.func @transform_6(%arg0: i32) -> (i32, i32) {
    %c0_i32 = arith.constant 0 : i32
    %c0_i32_0 = arith.constant 0 : i32
    %c0_i32_1 = arith.constant 0 : i32
    return %c0_i32, %c0_i32_0 : i32, i32
  }
  func.func @transform_7(%arg0: i32) -> (i32, i32) {
    %c0_i32 = arith.constant 0 : i32
    %c0_i32_0 = arith.constant 0 : i32
    %c0_i32_1 = arith.constant 0 : i32
    return %c0_i32, %c0_i32_0 : i32, i32
  }
  func.func @transform_8(%arg0: i32) -> (i32, i32) {
    %c0_i32 = arith.constant 0 : i32
    %c0_i32_0 = arith.constant 0 : i32
    %c0_i32_1 = arith.constant 0 : i32
    return %c0_i32, %c0_i32_0 : i32, i32
  }
  func.func @transform_9(%arg0: i32) -> (i32, i32) {
    %c0_i32 = arith.constant 0 : i32
    %c0_i32_0 = arith.constant 0 : i32
    %c0_i32_1 = arith.constant 0 : i32
    return %c0_i32, %c0_i32_0 : i32, i32
  }
  func.func @transform_10(%arg0: i32) -> (i32, i32) {
    %c0_i32 = arith.constant 0 : i32
    %c0_i32_0 = arith.constant 0 : i32
    return %arg0, %c0_i32 : i32, i32
  }
}

</mosaic_0001>

<llo_original>
// kernel: addnorm_pallas.1
$region0: #{addnorm_pallas.1}
  #allocation0 [shape = 'u32[]', space=smem, size = 0x4, offset = 0x4, fixed_abs, tag = 'smem constant byte address 0x4 - core index']
  #allocation1 [shape = 'u32[144,128]{1,0:T(1,128)}', space=vmem, size = 0x12000, scoped, tag = 'internal scratch']
  %s0 = inlined_call_operand.vmem [shape: f32[16,128], index: 0, kind: input, shape index: {}]
  %s1 = inlined_call_operand.vmem [shape: f32[16,128], index: 1, kind: input, shape index: {}]
  %s2 = inlined_call_operand.vmem [shape: f32[1,128], index: 2, kind: input, shape index: {}]
  %s3 = inlined_call_operand.vmem [shape: f32[1,128], index: 3, kind: input, shape index: {}]
  %s4 = inlined_call_operand.vmem [shape: bf16[128,128], index: 4, kind: input, shape index: {}]
  %s5 = inlined_call_operand.vmem [shape: f32[1,128], index: 5, kind: input, shape index: {}]
  %s6 = inlined_call_operand.vmem [shape: bf16[128,128], index: 6, kind: input, shape index: {}]
  %s7 = inlined_call_operand.vmem [shape: f32[1,128], index: 7, kind: input, shape index: {}]
  %s8 = inlined_call_operand.vmem [shape: f32[1,128], index: 8, kind: input, shape index: {}]
  %s9 = inlined_call_operand.vmem [shape: f32[1,128], index: 9, kind: input, shape index: {}]
  %s10 = inlined_call_operand.hbm [shape: f32[16,128], index: 10, kind: output, shape index: {}]
  %s11 = sld [smem:[#allocation0]]
  $region73: #{addnorm_pallas.1} parent=0
    _
  %s13 = ssub.s32 1, %s11
  %s14 = scalar_select 0, %s13, %s11
  $region1: #{addnorm_pallas.1} parent=0
    #allocation2 [shape = 'u8[8192]{0}', space=vmem, size = 0x2000, scoped, tag = 'output window, operand 0']
    #allocation3 [shape = 's32[2]{0}', space=sflag, size = 0x8, scoped, tag = 'scoped memory for addnorm_pallas.1']
    %15 = vsyncpa [#allocation3], 0
    %s16 = scalar_lea.sflag [#allocation3], 1
    %17 = vsyncpa %s16, 0
    loop: start=0, step=1, limit=4
    $region2: #{addnorm_pallas.1} parent=1 // loop_pre_header
      _
    $region3: #{addnorm_pallas.1} parent=1 // loop_header
      %s19 = sphi 0, %s23
      %p20 = scmp.ge.s32.totalorder %s19, 4
      %s29 = sphi 0, %s31
      %s32 = sphi 0, %s29
      %s33 = sphi 0, %s32
      %s49 = sphi 0, %s33
      %s55 = sphi 0, %s57
      %s58 = sphi 0, %s55
      %s59 = sphi 0, %s58
      %s75 = sphi 0, %s59
      %s79 = sphi 0, %s79
      %s81 = sphi 0, %s79
      %s82 = sphi 0, %s81
      %s96 = sphi 0, %s82
      %s100 = sphi 0, %s100
      %s102 = sphi 0, %s100
      %s103 = sphi 0, %s102
      %s117 = sphi 0, %s103
      %s121 = sphi 0, %s121
      %s123 = sphi 0, %s121
      %s124 = sphi 0, %s123
      %s138 = sphi 0, %s124
      %s142 = sphi 0, %s142
      %s144 = sphi 0, %s142
      %s145 = sphi 0, %s144
      %s159 = sphi 0, %s145
      %s163 = sphi 0, %s163
      %s165 = sphi 0, %s163
      %s166 = sphi 0, %s165
      %s180 = sphi 0, %s166
      %s184 = sphi 0, %s184
      %s186 = sphi 0, %s184
      %s187 = sphi 0, %s186
      %s201 = sphi 0, %s187
      %s205 = sphi 0, %s205
      %s207 = sphi 0, %s205
      %s208 = sphi 0, %s207
      %s222 = sphi 0, %s208
      %s226 = sphi 0, %s226
      %s228 = sphi 0, %s226
      %s229 = sphi 0, %s228
      %s243 = sphi 0, %s229
      %s249 = sphi 0, %s251
      %s252 = sphi 0, %s249
      %s253 = sphi 0, %s252
      %s269 = sphi 0, %s253
    $region4: #{addnorm_pallas.1} parent=1 // loop_header_branch
      %22 = sbr.rel (%p20) target = $region8
    $region5: #{addnorm_pallas.1} parent=1 // loop_body
      %s24 = ssub.s32 %s19, 1
      %s25 = ssub.s32 %s19, 2
      %s26 = sadd.s32 %s19, 1
      %s27 = ssub.s32 %s19, %s26
      %p28 = scmp.eq.s32.totalorder %s27, 0
      %s30 = sadd.s32 %s29, 1
      %s31 = scalar_select %p28, %s29, %s30
      %p34 = pneg %p28
      %p35 = scmp.eq.s32.totalorder %s19, 1
      %p36 = por %p34, %p35
      %p37 = scmp.ne.s32.totalorder %s29, %s32
      %p38 = scmp.eq.s32.totalorder %s19, 0
      %p39 = por %p37, %p38
      %p40 = scmp.ne.s32.totalorder %s29, %s32
      %p41 = scmp.eq.s32.totalorder %s24, 1
      %p42 = por %p40, %p41
      %p43 = scmp.ne.s32.totalorder %s32, %s33
      %p44 = scmp.eq.s32.totalorder %s24, 0
      %p45 = por %p43, %p44
      %p46 = scmp.ne.s32.totalorder %s32, %s33
      %p47 = scmp.eq.s32.totalorder %s25, 1
      %p48 = por %p46, %p47
      %p50 = scmp.ne.s32.totalorder %s33, %s49
      %p51 = scmp.eq.s32.totalorder %s25, 0
      %p52 = por %p50, %p51
      %s53 = ssub.s32 %s19, %s26
      %p54 = scmp.eq.s32.totalorder %s53, 0
      %s56 = sadd.s32 %s55, 1
      %s57 = scalar_select %p54, %s55, %s56
      %p60 = pneg %p54
      %p61 = scmp.eq.s32.totalorder %s19, 1
      %p62 = por %p60, %p61
      %p63 = scmp.ne.s32.totalorder %s55, %s58
      %p64 = scmp.eq.s32.totalorder %s19, 0
      %p65 = por %p63, %p64
      %p66 = scmp.ne.s32.totalorder %s55, %s58
      %p67 = scmp.eq.s32.totalorder %s24, 1
      %p68 = por %p66, %p67
      %p69 = scmp.ne.s32.totalorder %s58, %s59
      %p70 = scmp.eq.s32.totalorder %s24, 0
      %p71 = por %p69, %p70
      %p72 = scmp.ne.s32.totalorder %s58, %s59
      %p73 = scmp.eq.s32.totalorder %s25, 1
      %p74 = por %p72, %p73
      %p76 = scmp.ne.s32.totalorder %s59, %s75
      %p77 = scmp.eq.s32.totalorder %s25, 0
      %p78 = por %p76, %p77
      %s80 = sadd.s32 %s79, 1
      %p83 = scmp.eq.s32.totalorder %s19, 1
      %p84 = scmp.ne.s32.totalorder %s79, %s81
      %p85 = scmp.eq.s32.totalorder %s19, 0
      %p86 = por %p84, %p85
      %p87 = scmp.ne.s32.totalorder %s79, %s81
      %p88 = scmp.eq.s32.totalorder %s24, 1
      %p89 = por %p87, %p88
      %p90 = scmp.ne.s32.totalorder %s81, %s82
      %p91 = scmp.eq.s32.totalorder %s24, 0
      %p92 = por %p90, %p91
      %p93 = scmp.ne.s32.totalorder %s81, %s82
      %p94 = scmp.eq.s32.totalorder %s25, 1
      %p95 = por %p93, %p94
      %p97 = scmp.ne.s32.totalorder %s82, %s96
      %p98 = scmp.eq.s32.totalorder %s25, 0
      %p99 = por %p97, %p98
      %s101 = sadd.s32 %s100, 1
      %p104 = scmp.eq.s32.totalorder %s19, 1
      %p105 = scmp.ne.s32.totalorder %s100, %s102
      %p106 = scmp.eq.s32.totalorder %s19, 0
      %p107 = por %p105, %p106
      %p108 = scmp.ne.s32.totalorder %s100, %s102
      %p109 = scmp.eq.s32.totalorder %s24, 1
      %p110 = por %p108, %p109
      %p111 = scmp.ne.s32.totalorder %s102, %s103
      %p112 = scmp.eq.s32.totalorder %s24, 0
      %p113 = por %p111, %p112
      %p114 = scmp.ne.s32.totalorder %s102, %s103
      %p115 = scmp.eq.s32.totalorder %s25, 1
      %p116 = por %p114, %p115
      %p118 = scmp.ne.s32.totalorder %s103, %s117
      %p119 = scmp.eq.s32.totalorder %s25, 0
      %p120 = por %p118, %p119
      %s122 = sadd.s32 %s121, 1
      %p125 = scmp.eq.s32.totalorder %s19, 1
      %p126 = scmp.ne.s32.totalorder %s121, %s123
      %p127 = scmp.eq.s32.totalorder %s19, 0
      %p128 = por %p126, %p127
      %p129 = scmp.ne.s32.totalorder %s121, %s123
      %p130 = scmp.eq.s32.totalorder %s24, 1
      %p131 = por %p129, %p130
      %p132 = scmp.ne.s32.totalorder %s123, %s124
      %p133 = scmp.eq.s32.totalorder %s24, 0
      %p134 = por %p132, %p133
      %p135 = scmp.ne.s32.totalorder %s123, %s124
      %p136 = scmp.eq.s32.totalorder %s25, 1
      %p137 = por %p135, %p136
      %p139 = scmp.ne.s32.totalorder %s124, %s138
      %p140 = scmp.eq.s32.totalorder %s25, 0
      %p141 = por %p139, %p140
      %s143 = sadd.s32 %s142, 1
      %p146 = scmp.eq.s32.totalorder %s19, 1
      %p147 = scmp.ne.s32.totalorder %s142, %s144
      %p148 = scmp.eq.s32.totalorder %s19, 0
      %p149 = por %p147, %p148
      %p150 = scmp.ne.s32.totalorder %s142, %s144
      %p151 = scmp.eq.s32.totalorder %s24, 1
      %p152 = por %p150, %p151
      %p153 = scmp.ne.s32.totalorder %s144, %s145
      %p154 = scmp.eq.s32.totalorder %s24, 0
      %p155 = por %p153, %p154
      %p156 = scmp.ne.s32.totalorder %s144, %s145
      %p157 = scmp.eq.s32.totalorder %s25, 1
      %p158 = por %p156, %p157
      %p160 = scmp.ne.s32.totalorder %s145, %s159
      %p161 = scmp.eq.s32.totalorder %s25, 0
      %p162 = por %p160, %p161
      %s164 = sadd.s32 %s163, 1
      %p167 = scmp.eq.s32.totalorder %s19, 1
      %p168 = scmp.ne.s32.totalorder %s163, %s165
      %p169 = scmp.eq.s32.totalorder %s19, 0
      %p170 = por %p168, %p169
      %p171 = scmp.ne.s32.totalorder %s163, %s165
      %p172 = scmp.eq.s32.totalorder %s24, 1
      %p173 = por %p171, %p172
      %p174 = scmp.ne.s32.totalorder %s165, %s166
      %p175 = scmp.eq.s32.totalorder %s24, 0
      %p176 = por %p174, %p175
      %p177 = scmp.ne.s32.totalorder %s165, %s166
      %p178 = scmp.eq.s32.totalorder %s25, 1
      %p179 = por %p177, %p178
      %p181 = scmp.ne.s32.totalorder %s166, %s180
      %p182 = scmp.eq.s32.totalorder %s25, 0
      %p183 = por %p181, %p182
      %s185 = sadd.s32 %s184, 1
      %p188 = scmp.eq.s32.totalorder %s19, 1
      %p189 = scmp.ne.s32.totalorder %s184, %s186
      %p190 = scmp.eq.s32.totalorder %s19, 0
      %p191 = por %p189, %p190
      %p192 = scmp.ne.s32.totalorder %s184, %s186
      %p193 = scmp.eq.s32.totalorder %s24, 1
      %p194 = por %p192, %p193
      %p195 = scmp.ne.s32.totalorder %s186, %s187
      %p196 = scmp.eq.s32.totalorder %s24, 0
      %p197 = por %p195, %p196
      %p198 = scmp.ne.s32.totalorder %s186, %s187
      %p199 = scmp.eq.s32.totalorder %s25, 1
      %p200 = por %p198, %p199
      %p202 = scmp.ne.s32.totalorder %s187, %s201
      %p203 = scmp.eq.s32.totalorder %s25, 0
      %p204 = por %p202, %p203
      %s206 = sadd.s32 %s205, 1
      %p209 = scmp.eq.s32.totalorder %s19, 1
      %p210 = scmp.ne.s32.totalorder %s205, %s207
      %p211 = scmp.eq.s32.totalorder %s19, 0
      %p212 = por %p210, %p211
      %p213 = scmp.ne.s32.totalorder %s205, %s207
      %p214 = scmp.eq.s32.totalorder %s24, 1
      %p215 = por %p213, %p214
      %p216 = scmp.ne.s32.totalorder %s207, %s208
      %p217 = scmp.eq.s32.totalorder %s24, 0
      %p218 = por %p216, %p217
      %p219 = scmp.ne.s32.totalorder %s207, %s208
      %p220 = scmp.eq.s32.totalorder %s25, 1
      %p221 = por %p219, %p220
      %p223 = scmp.ne.s32.totalorder %s208, %s222
      %p224 = scmp.eq.s32.totalorder %s25, 0
      %p225 = por %p223, %p224
      %s227 = sadd.s32 %s226, 1
      %p230 = scmp.eq.s32.totalorder %s19, 1
      %p231 = scmp.ne.s32.totalorder %s226, %s228
      %p232 = scmp.eq.s32.totalorder %s19, 0
      %p233 = por %p231, %p232
      %p234 = scmp.ne.s32.totalorder %s226, %s228
      %p235 = scmp.eq.s32.totalorder %s24, 1
      %p236 = por %p234, %p235
      %p237 = scmp.ne.s32.totalorder %s228, %s229
      %p238 = scmp.eq.s32.totalorder %s24, 0
      %p239 = por %p237, %p238
      %p240 = scmp.ne.s32.totalorder %s228, %s229
      %p241 = scmp.eq.s32.totalorder %s25, 1
      %p242 = por %p240, %p241
      %p244 = scmp.ne.s32.totalorder %s229, %s243
      %p245 = scmp.eq.s32.totalorder %s25, 0
      %p246 = por %p244, %p245
      %s247 = ssub.s32 %s19, %s26
      %p248 = scmp.eq.s32.totalorder %s247, 0
      %s250 = sadd.s32 %s249, 1
      %s251 = scalar_select %p248, %s249, %s250
      %p254 = pneg %p248
      %p255 = scmp.eq.s32.totalorder %s19, 1
      %p256 = por %p254, %p255
      %p257 = scmp.ne.s32.totalorder %s249, %s252
      %p258 = scmp.eq.s32.totalorder %s19, 0
      %p259 = por %p257, %p258
      %p260 = scmp.ne.s32.totalorder %s249, %s252
      %p261 = scmp.eq.s32.totalorder %s24, 1
      %p262 = por %p260, %p261
      %p263 = scmp.ne.s32.totalorder %s252, %s253
      %p264 = scmp.eq.s32.totalorder %s24, 0
      %p265 = por %p263, %p264
      %p266 = scmp.ne.s32.totalorder %s252, %s253
      %p267 = scmp.eq.s32.totalorder %s25, 1
      %p268 = por %p266, %p267
      %p270 = scmp.ne.s32.totalorder %s253, %s269
      %p271 = scmp.eq.s32.totalorder %s25, 0
      %p272 = por %p270, %p271
      %p273 = scmp.le.s32.totalorder 1, %s19
      %p274 = scmp.lt.s32.totalorder %s19, 3
      %p275 = pnand %p273, %p274
      %p276 = pneg %p275
      // Predicated region
      $region9: #{addnorm_pallas.1} parent=5 // pred_check
        _
      $region10: #{addnorm_pallas.1} parent=5 // pred_check_branch
        %278 = sbr.rel (%p275) target = $region12
      $region11: #{addnorm_pallas.1} parent=5 // pred_region
        %s279 = ssub.s32 %s19, 1
        // Predicated region
        $region13: #{addnorm_pallas.1} parent=11 // pred_check
          %p280 = pneg %p92
        $region14: #{addnorm_pallas.1} parent=11 // pred_check_branch
          %282 = sbr.rel (%p280) target = $region16
        $region15: #{addnorm_pallas.1} parent=11 // pred_region
          _
        $region16: #{addnorm_pallas.1} parent=11 // pred_fallthru
          _
        // Predicated region
        $region17: #{addnorm_pallas.1} parent=11 // pred_check
          %p283 = pneg %p113
        $region18: #{addnorm_pallas.1} parent=11 // pred_check_branch
          %285 = sbr.rel (%p283) target = $region20
        $region19: #{addnorm_pallas.1} parent=11 // pred_region
          _
        $region20: #{addnorm_pallas.1} parent=11 // pred_fallthru
          _
        // Predicated region
        $region21: #{addnorm_pallas.1} parent=11 // pred_check
          %p286 = pneg %p134
        $region22: #{addnorm_pallas.1} parent=11 // pred_check_branch
          %288 = sbr.rel (%p286) target = $region24
        $region23: #{addnorm_pallas.1} parent=11 // pred_region
          _
        $region24: #{addnorm_pallas.1} parent=11 // pred_fallthru
          _
        // Predicated region
        $region25: #{addnorm_pallas.1} parent=11 // pred_check
          %p289 = pneg %p155
        $region26: #{addnorm_pallas.1} parent=11 // pred_check_branch
          %291 = sbr.rel (%p289) target = $region28
        $region27: #{addnorm_pallas.1} parent=11 // pred_region
          _
        $region28: #{addnorm_pallas.1} parent=11 // pred_fallthru
          _
        // Predicated region
        $region29: #{addnorm_pallas.1} parent=11 // pred_check
          %p292 = pneg %p176
        $region30: #{addnorm_pallas.1} parent=11 // pred_check_branch
          %294 = sbr.rel (%p292) target = $region32
        $region31: #{addnorm_pallas.1} parent=11 // pred_region
          _
        $region32: #{addnorm_pallas.1} parent=11 // pred_fallthru
          _
        // Predicated region
        $region33: #{addnorm_pallas.1} parent=11 // pred_check
          %p295 = pneg %p197
        $region34: #{addnorm_pallas.1} parent=11 // pred_check_branch
          %297 = sbr.rel (%p295) target = $region36
        $region35: #{addnorm_pallas.1} parent=11 // pred_region
          _
        $region36: #{addnorm_pallas.1} parent=11 // pred_fallthru
          _
        // Predicated region
        $region37: #{addnorm_pallas.1} parent=11 // pred_check
          %p298 = pneg %p218
        $region38: #{addnorm_pallas.1} parent=11 // pred_check_branch
          %300 = sbr.rel (%p298) target = $region40
        $region39: #{addnorm_pallas.1} parent=11 // pred_region
          _
        $region40: #{addnorm_pallas.1} parent=11 // pred_fallthru
          _
        // Predicated region
        $region41: #{addnorm_pallas.1} parent=11 // pred_check
          %p301 = pneg %p239
        $region42: #{addnorm_pallas.1} parent=11 // pred_check_branch
          %303 = sbr.rel (%p301) target = $region44
        $region43: #{addnorm_pallas.1} parent=11 // pred_region
          _
        $region44: #{addnorm_pallas.1} parent=11 // pred_fallthru
          _
      $region12: #{addnorm_pallas.1} parent=5 // pred_fallthru
        _
      %p304 = scmp.lt.s32.totalorder %s19, 2
      // Predicated region
      $region45: #{addnorm_pallas.1} parent=5 // pred_check
        %p305 = pneg %p304
      $region46: #{addnorm_pallas.1} parent=5 // pred_check_branch
        %307 = sbr.rel (%p305) target = $region48
      $region47: #{addnorm_pallas.1} parent=5 // pred_region
        // Predicated region
        $region49: #{addnorm_pallas.1} parent=47 // pred_check
          %p308 = pneg %p39
        $region50: #{addnorm_pallas.1} parent=47 // pred_check_branch
          %310 = sbr.rel (%p308) target = $region52
        $region51: #{addnorm_pallas.1} parent=47 // pred_region
          %p311 = scmp.lt.s32.totalorder %s19, 1
          %s312 = scalar_select %p311, %s19, 1
          %s313 = smul.addr %s312, 8
          %s314 = scalar_lea.vmem %s0, %s313
        $region52: #{addnorm_pallas.1} parent=47 // pred_fallthru
          _
        // Predicated region
        $region53: #{addnorm_pallas.1} parent=47 // pred_check
          %p315 = pneg %p65
        $region54: #{addnorm_pallas.1} parent=47 // pred_check_branch
          %317 = sbr.rel (%p315) target = $region56
        $region55: #{addnorm_pallas.1} parent=47 // pred_region
          %p318 = scmp.lt.s32.totalorder %s19, 1
          %s319 = scalar_select %p318, %s19, 1
          %s320 = smul.addr %s319, 8
          %s321 = scalar_lea.vmem %s1, %s320
        $region56: #{addnorm_pallas.1} parent=47 // pred_fallthru
          _
      $region48: #{addnorm_pallas.1} parent=5 // pred_fallthru
        _
      %p322 = scmp.le.s32.totalorder 1, %s19
      %p323 = scmp.lt.s32.totalorder %s19, 3
      %p324 = pnand %p322, %p323
      %p325 = pneg %p324
      // Predicated region
      $region57: #{addnorm_pallas.1} parent=5 // pred_check
        _
      $region58: #{addnorm_pallas.1} parent=5 // pred_check_branch
        %327 = sbr.rel (%p324) target = $region60
      $region59: #{addnorm_pallas.1} parent=5 // pred_region
        %s328 = ssub.s32 %s19, 1
        %p329 = scmp.lt.s32.totalorder %s24, 1
        %s330 = scalar_select %p329, %s24, 1
        %s331 = smul.addr %s330, 8
        %s332 = scalar_lea.vmem %s0, %s331
        %p333 = pneg %p45
        %p334 = pneg %p42
        %p335 = scmp.lt.s32.totalorder %s24, 1
        %s336 = scalar_select %p335, %s24, 1
        %s337 = smul.addr %s336, 8
        %s338 = scalar_lea.vmem %s1, %s337
        %p339 = pneg %p71
        %p340 = pneg %p68
        %p341 = pneg %p92
        %p342 = pneg %p89
        %p343 = pneg %p113
        %p344 = pneg %p110
        %p345 = pneg %p134
        %p346 = pneg %p131
        %p347 = pneg %p155
        %p348 = pneg %p152
        %p349 = pneg %p176
        %p350 = pneg %p173
        %p351 = pneg %p197
        %p352 = pneg %p194
        %p353 = pneg %p218
        %p354 = pneg %p215
        %p355 = pneg %p239
        %p356 = pneg %p236
        %p357 = pneg %p265
        %p358 = pneg %p262
        %s359 = sand.u32 %s252, 1
        %s360 = scalar_lea.sflag [#allocation3], %s359
        %s361 = sand.u32 %s252, 1
        %s362 = smul.addr %s361, 8
        %s363 = scalar_lea.vmem [#allocation2], %s362
        %p364 = scmp.lt.s32.totalorder %s24, 1
        %s365 = scalar_select %p364, %s24, 1
        %s366 = smul.addr %s365, 8
        %s367 = scalar_lea.vmem %s0, %s366
        %p368 = scmp.lt.s32.totalorder %s24, 1
        %s369 = scalar_select %p368, %s24, 1
        %s370 = smul.addr %s369, 8
        %s371 = scalar_lea.vmem %s1, %s370
        %v373 = vld [vmem:[%s367] sm:$0xff]
        %v374 = vld [vmem:[%s371] sm:$0xff]
        %v375 = vadd.f32 %v373, %v374
        %v376 = vld [vmem:[%s2] sm:$0x1]
        %v377 = vld [vmem:[%s3] sm:$0x1]
        %378 = vadd.xlane.f32.xlu0 %v375
        %v379 = vpop.xlane.xlu0 %378
        %v380 = vrcp.pop 128.0
        %v381 = vmul.f32 %v379, %v380
        %v382 = vsub.f32 %v375, %v381
        %v383 = vmul.f32 %v382, %v382
        %384 = vadd.xlane.f32.xlu0 %v383
        %v385 = vpop.xlane.xlu0 %384
        %v386 = vmul.f32 %v385, %v380
        %v387 = vadd.f32 %v386, 1e-05
        %v388 = vrsqrt.pop %v387
        %v389 = vmul.f32 %v382, %v388
        %v391 = vlaneseq
        %v392 = vshrl.u32 %v391, 7
        %v393 = vsub.s32 0, %v392
        %v394 = vrot.slane %v376, %v393
        %v396 = vmul.f32 %v389, %v394
        %v398 = vlaneseq
        %v399 = vshrl.u32 %v398, 7
        %v400 = vsub.s32 0, %v399
        %v401 = vrot.slane %v377, %v400
        %v403 = vadd.f32 %v396, %v401
        %v404 = vpack.c.bf16 %v403, %v403
        %v405 = vld [vmem:[%s4] sm:$0xf]
        %v406 = vld [vmem:[%s4 + $0x4] sm:$0xf]
        %v407 = vld [vmem:[%s4 + $0x8] sm:$0xf]
        %v408 = vld [vmem:[%s4 + $0xc] sm:$0xf]
        %v409 = vld [vmem:[%s4 + $0x10] sm:$0xf]
        %v410 = vld [vmem:[%s4 + $0x14] sm:$0xf]
        %v411 = vld [vmem:[%s4 + $0x18] sm:$0xf]
        %v412 = vld [vmem:[%s4 + $0x1c] sm:$0xf]
        %v413 = vld [vmem:[%s4 + $0x20] sm:$0xf]
        %v414 = vld [vmem:[%s4 + $0x24] sm:$0xf]
        %v415 = vld [vmem:[%s4 + $0x28] sm:$0xf]
        %v416 = vld [vmem:[%s4 + $0x2c] sm:$0xf]
        %v417 = vld [vmem:[%s4 + $0x30] sm:$0xf]
        %v418 = vld [vmem:[%s4 + $0x34] sm:$0xf]
        %v419 = vld [vmem:[%s4 + $0x38] sm:$0xf]
        %v420 = vld [vmem:[%s4 + $0x3c] sm:$0xf]
        %v421 = vld [vmem:[%s5] sm:$0x1]
        %v423 = vlaneseq
        %v424 = vshrl.u32 %v423, 7
        %v425 = vsub.s32 0, %v424
        %v426 = vrot.slane %v421, %v425
        %v444 = vunpack.c.l.b16 %v405
        %v445 = vunpack.c.l.b16 %v406
        %v446 = vunpack.c.l.b16 %v407
        %v447 = vunpack.c.l.b16 %v408
        %v448 = vunpack.c.l.b16 %v409
        %v449 = vunpack.c.l.b16 %v410
        %v450 = vunpack.c.l.b16 %v411
        %v451 = vunpack.c.l.b16 %v412
        %v452 = vunpack.c.l.b16 %v413
        %v453 = vunpack.c.l.b16 %v414
        %v454 = vunpack.c.l.b16 %v415
        %v455 = vunpack.c.l.b16 %v416
        %v456 = vunpack.c.l.b16 %v417
        %v457 = vunpack.c.l.b16 %v418
        %v458 = vunpack.c.l.b16 %v419
        %v459 = vunpack.c.l.b16 %v420
        %v460 = vpack.c.b16 %v445, %v444
        %v461 = vpack.c.b16 %v447, %v446
        %v462 = vpack.c.b16 %v449, %v448
        %v463 = vpack.c.b16 %v451, %v450
        %v464 = vpack.c.b16 %v453, %v452
        %v465 = vpack.c.b16 %v455, %v454
        %v466 = vpack.c.b16 %v457, %v456
        %v467 = vpack.c.b16 %v459, %v458
        %476 = vmatprep.subr.bf16.mxu0 0
        %477 = vmatpush1.bf16.msra.mxu0 %v460
        %478 = vmatprep.subr.bf16.mxu0 0
        %479 = vmatpush1.bf16.msra.mxu0 %v461
        %480 = vmatprep.subr.bf16.mxu0 0
        %481 = vmatpush1.bf16.msra.mxu0 %v462
        %482 = vmatprep.subr.bf16.mxu0 0
        %483 = vmatpush1.bf16.msra.mxu0 %v463
        %484 = vmatprep.subr.bf16.mxu0 0
        %485 = vmatpush1.bf16.msra.mxu0 %v464
        %486 = vmatprep.subr.bf16.mxu0 0
        %487 = vmatpush1.bf16.msra.mxu0 %v465
        %488 = vmatprep.subr.bf16.mxu0 0
        %489 = vmatpush1.bf16.msra.mxu0 %v466
        %490 = vmatprep.subr.bf16.mxu0 0
        %491 = vmatpush1.bf16.msra.mxu0 %v467
        %492 = vmatprep.subr.bf16.mxu0 0
        %493 = vmatpush1.bf16.msra.mxu0 0
        %494 = vmatprep.subr.bf16.mxu0 0
        %495 = vmatpush1.bf16.msra.mxu0 0
        %496 = vmatprep.subr.bf16.mxu0 0
        %497 = vmatpush1.bf16.msra.mxu0 0
        %498 = vmatprep.subr.bf16.mxu0 0
        %499 = vmatpush1.bf16.msra.mxu0 0
        %500 = vmatprep.subr.bf16.mxu0 0
        %501 = vmatpush1.bf16.msra.mxu0 0
        %502 = vmatprep.subr.bf16.mxu0 0
        %503 = vmatpush1.bf16.msra.mxu0 0
        %504 = vmatprep.subr.bf16.mxu0 0
        %505 = vmatpush1.bf16.msra.mxu0 0
        %506 = vmatprep.subr.bf16.mxu0 0
        %507 = vmatpush1.bf16.msra.mxu0 0
        %508 = vmatprep.mubr.bf16.mxu0 0
        %509 = vmatmul.mubr.bf16.gmra.mrb[0].mxu0 %v404
        %v510 = vpop.f32.mrb[0].mxu0
        %v511 = vadd.f32 %v426, %v510
        %v512 = vpop.f32.mrb[0].mxu0
        %v513 = vpop.f32.mrb[0].mxu0
        %v514 = vpop.f32.mrb[0].mxu0
        %515 = vdwg.mxu0
        %v516 = vmul.f32 %v511, 0.5
        %v517 = vmul.f32 %v511, 0.044715
        %v518 = vmul.f32 %v517, %v511
        %v519 = vmul.f32 %v518, %v511
        %v520 = vadd.f32 %v511, %v519
        %v521 = vmul.f32 %v520, 0.7978846
        %v522 = vtanh.pop %v521
        %v523 = vadd.f32 %v522, 1.0
        %v524 = vmul.f32 %v516, %v523
        %v525 = vpack.c.bf16 %v524, %v524
        %v526 = vld [vmem:[%s6] sm:$0xf]
        %v527 = vld [vmem:[%s6 + $0x4] sm:$0xf]
        %v528 = vld [vmem:[%s6 + $0x8] sm:$0xf]
        %v529 = vld [vmem:[%s6 + $0xc] sm:$0xf]
        %v530 = vld [vmem:[%s6 + $0x10] sm:$0xf]
        %v531 = vld [vmem:[%s6 + $0x14] sm:$0xf]
        %v532 = vld [vmem:[%s6 + $0x18] sm:$0xf]
        %v533 = vld [vmem:[%s6 + $0x1c] sm:$0xf]
        %v534 = vld [vmem:[%s6 + $0x20] sm:$0xf]
        %v535 = vld [vmem:[%s6 + $0x24] sm:$0xf]
        %v536 = vld [vmem:[%s6 + $0x28] sm:$0xf]
        %v537 = vld [vmem:[%s6 + $0x2c] sm:$0xf]
        %v538 = vld [vmem:[%s6 + $0x30] sm:$0xf]
        %v539 = vld [vmem:[%s6 + $0x34] sm:$0xf]
        %v540 = vld [vmem:[%s6 + $0x38] sm:$0xf]
        %v541 = vld [vmem:[%s6 + $0x3c] sm:$0xf]
        %v542 = vld [vmem:[%s7] sm:$0x1]
        %v544 = vlaneseq
        %v545 = vshrl.u32 %v544, 7
        %v546 = vsub.s32 0, %v545
        %v547 = vrot.slane %v542, %v546
        %v565 = vunpack.c.l.b16 %v526
        %v566 = vunpack.c.l.b16 %v527
        %v567 = vunpack.c.l.b16 %v528
        %v568 = vunpack.c.l.b16 %v529
        %v569 = vunpack.c.l.b16 %v530
        %v570 = vunpack.c.l.b16 %v531
        %v571 = vunpack.c.l.b16 %v532
        %v572 = vunpack.c.l.b16 %v533
        %v573 = vunpack.c.l.b16 %v534
        %v574 = vunpack.c.l.b16 %v535
        %v575 = vunpack.c.l.b16 %v536
        %v576 = vunpack.c.l.b16 %v537
        %v577 = vunpack.c.l.b16 %v538
        %v578 = vunpack.c.l.b16 %v539
        %v579 = vunpack.c.l.b16 %v540
        %v580 = vunpack.c.l.b16 %v541
        %v581 = vpack.c.b16 %v566, %v565
        %v582 = vpack.c.b16 %v568, %v567
        %v583 = vpack.c.b16 %v570, %v569
        %v584 = vpack.c.b16 %v572, %v571
        %v585 = vpack.c.b16 %v574, %v573
        %v586 = vpack.c.b16 %v576, %v575
        %v587 = vpack.c.b16 %v578, %v577
        %v588 = vpack.c.b16 %v580, %v579
        %597 = vmatprep.subr.bf16.mxu0 0
        %598 = vmatpush1.bf16.msra.mxu0 %v581
        %599 = vmatprep.subr.bf16.mxu0 0
        %600 = vmatpush1.bf16.msra.mxu0 %v582
        %601 = vmatprep.subr.bf16.mxu0 0
        %602 = vmatpush1.bf16.msra.mxu0 %v583
        %603 = vmatprep.subr.bf16.mxu0 0
        %604 = vmatpush1.bf16.msra.mxu0 %v584
        %605 = vmatprep.subr.bf16.mxu0 0
        %606 = vmatpush1.bf16.msra.mxu0 %v585
        %607 = vmatprep.subr.bf16.mxu0 0
        %608 = vmatpush1.bf16.msra.mxu0 %v586
        %609 = vmatprep.subr.bf16.mxu0 0
        %610 = vmatpush1.bf16.msra.mxu0 %v587
        %611 = vmatprep.subr.bf16.mxu0 0
        %612 = vmatpush1.bf16.msra.mxu0 %v588
        %613 = vmatprep.subr.bf16.mxu0 0
        %614 = vmatpush1.bf16.msra.mxu0 0
        %615 = vmatprep.subr.bf16.mxu0 0
        %616 = vmatpush1.bf16.msra.mxu0 0
        %617 = vmatprep.subr.bf16.mxu0 0
        %618 = vmatpush1.bf16.msra.mxu0 0
        %619 = vmatprep.subr.bf16.mxu0 0
        %620 = vmatpush1.bf16.msra.mxu0 0
        %621 = vmatprep.subr.bf16.mxu0 0
        %622 = vmatpush1.bf16.msra.mxu0 0
        %623 = vmatprep.subr.bf16.mxu0 0
        %624 = vmatpush1.bf16.msra.mxu0 0
        %625 = vmatprep.subr.bf16.mxu0 0
        %626 = vmatpush1.bf16.msra.mxu0 0
        %627 = vmatprep.subr.bf16.mxu0 0
        %628 = vmatpush1.bf16.msra.mxu0 0
        %629 = vmatprep.mubr.bf16.mxu0 0
        %630 = vmatmul.mubr.bf16.gmra.mrb[0].mxu0 %v525
        %v631 = vpop.f32.mrb[0].mxu0
        %v632 = vadd.f32 %v547, %v631
        %v633 = vpop.f32.mrb[0].mxu0
        %v634 = vpop.f32.mrb[0].mxu0
        %v635 = vpop.f32.mrb[0].mxu0
        %636 = vdwg.mxu0
        %v637 = vadd.f32 %v632, %v403
        %v638 = vld [vmem:[%s8] sm:$0x1]
        %v639 = vld [vmem:[%s9] sm:$0x1]
        %640 = vadd.xlane.f32.xlu0 %v637
        %v641 = vpop.xlane.xlu0 %640
        %v642 = vmul.f32 %v641, %v380
        %v643 = vsub.f32 %v637, %v642
        %v644 = vmul.f32 %v643, %v643
        %645 = vadd.xlane.f32.xlu0 %v644
        %v646 = vpop.xlane.xlu0 %645
        %v647 = vmul.f32 %v646, %v380
        %v648 = vadd.f32 %v647, 1e-05
        %v649 = vrsqrt.pop %v648
        %v650 = vmul.f32 %v643, %v649
        %v652 = vlaneseq
        %v653 = vshrl.u32 %v652, 7
        %v654 = vsub.s32 0, %v653
        %v655 = vrot.slane %v638, %v654
        %v657 = vmul.f32 %v650, %v655
        %v659 = vlaneseq
        %v660 = vshrl.u32 %v659, 7
        %v661 = vsub.s32 0, %v660
        %v662 = vrot.slane %v639, %v661
        %v664 = vadd.f32 %v657, %v662
        %665 = vst [vmem:[%s363] sm:$0xff] %v664
        %s666 = sand.u32 %s252, 1
        %s667 = scalar_lea.sflag [#allocation3], %s666
        %s668 = sand.u32 %s252, 1
        %s669 = smul.addr %s668, 8
        %s670 = scalar_lea.vmem [#allocation2], %s669
        // Predicated region
        $region61: #{addnorm_pallas.1} parent=59 // pred_check
          %p671 = pneg %p262
        $region62: #{addnorm_pallas.1} parent=59 // pred_check_branch
          %673 = sbr.rel (%p671) target = $region64
        $region63: #{addnorm_pallas.1} parent=59 // pred_region
          %s675 = ssub.s32 128, 128
          %676 = vsyncadd %s667, %s675
          %s677 = smul.addr %s24, 128
          %s678 = scalar_lea.hbm %s10, %s677
          %s680 = sshll.u32 %s670, 4
          %s681 = int_to_ptr.vmem [resolvable:$true] %s680
          %683 = dma.vmem_to_hbm [thread:$0]  %s681, 128, %s678, %s667
        $region64: #{addnorm_pallas.1} parent=59 // pred_fallthru
          _
      $region60: #{addnorm_pallas.1} parent=5 // pred_fallthru
        _
      %p684 = scmp.le.s32.totalorder 2, %s19
      // Predicated region
      $region65: #{addnorm_pallas.1} parent=5 // pred_check
        %p685 = pneg %p684
      $region66: #{addnorm_pallas.1} parent=5 // pred_check_branch
        %687 = sbr.rel (%p685) target = $region68
      $region67: #{addnorm_pallas.1} parent=5 // pred_region
        %s688 = ssub.s32 %s19, 2
        // Predicated region
        $region69: #{addnorm_pallas.1} parent=67 // pred_check
          %p689 = pneg %p268
        $region70: #{addnorm_pallas.1} parent=67 // pred_check_branch
          %691 = sbr.rel (%p689) target = $region72
        $region71: #{addnorm_pallas.1} parent=67 // pred_region
          %s692 = sand.u32 %s253, 1
          %s693 = scalar_lea.sflag [#allocation3], %s692
          %s694 = sand.u32 %s253, 1
          %s695 = smul.addr %s694, 8
          %s696 = scalar_lea.vmem [#allocation2], %s695
          %697 = dma.done %s693, 128
        $region72: #{addnorm_pallas.1} parent=67 // pred_fallthru
          _
      $region68: #{addnorm_pallas.1} parent=5 // pred_fallthru
        _
    $region6: #{addnorm_pallas.1} parent=1 // loop_footer
      %s23 = sadd.s32 1, %s19
    $region7: #{addnorm_pallas.1} parent=1 // loop_footer_branch
      %18 = sbr.rel target = $region3
    $region8: #{addnorm_pallas.1} parent=1 // loop_exit
      _
    %698 = vsyncpa [#allocation3], 1
    %s699 = scalar_lea.sflag [#allocation3], 1
    %700 = vsyncpa %s699, 1

</llo_original>
